<compile_context>
chip_gen: v7x
topology: tpu7x:2x2x1
jax: 0.10.0
libtpu: 0.0.40
codegen_flags: <defaults>
</compile_context>

<pallas_src>
import functools

import jax
import jax.numpy as jnp
from jax.experimental import pallas as pl
from jax.experimental.pallas import tpu as pltpu

LANE = 128
SUBLANE = 8


def _round_up(x, m):
    return ((x + m - 1) // m) * m


def qnet_kernel(x_ref, w1_ref, b1_ref, w2_ref, b2_ref, w3_ref, b3_ref, o_ref):
    # x arrives f32 straight from HBM; cast to bf16 in-kernel (free on the VPU here).
    x = x_ref[...].astype(jnp.bfloat16)                                # (TB, S) bf16

    h1 = jnp.dot(x, w1_ref[...], preferred_element_type=jnp.float32) + b1_ref[...]
    h1 = jnp.maximum(h1, 0.0)                                          # f32 (TB, 64)

    h2 = jnp.dot(h1.astype(jnp.bfloat16), w2_ref[...],
                 preferred_element_type=jnp.float32) + b2_ref[...]
    h2 = jnp.maximum(h2, 0.0)                                          # f32 (TB, 64)

    out = jnp.dot(h2.astype(jnp.bfloat16), w3_ref[...],
                  preferred_element_type=jnp.float32) + b3_ref[...]    # f32 (TB, A_pad)
    o_ref[...] = out.astype(o_ref.dtype)                               # bf16 lane-dense store


def prepare_params(params):
    """One-time param prep: pad fc3 to a lane-dense width and cast weights to bf16.

    Returns (prepped_params, num_actions). Call once, reuse across all forward calls.
    """
    w1, b1 = params["w1"], params["b1"]
    w2, b2 = params["w2"], params["b2"]
    w3, b3 = params["w3"], params["b3"]
    hidden = w1.shape[1]
    num_actions = w3.shape[1]

    na_pad = _round_up(max(num_actions, LANE), LANE)
    w3p = jnp.zeros((hidden, na_pad), w3.dtype).at[:, :num_actions].set(w3)
    b3p = jnp.zeros((1, na_pad), b3.dtype).at[:, :num_actions].set(b3)

    prepped = {
        "w1": w1.astype(jnp.bfloat16), "b1": b1.astype(jnp.float32),
        "w2": w2.astype(jnp.bfloat16), "b2": b2.astype(jnp.float32),
        "w3": w3p.astype(jnp.bfloat16), "b3": b3p.astype(jnp.float32),
    }
    return prepped, num_actions


@functools.partial(jax.jit, static_argnames=("num_actions", "batch_tile"))
def qnetwork_forward(x, prepped, *, num_actions, batch_tile=2048):
    """x: (batch, num_states) float32. prepped: output of prepare_params()."""
    w1, b1 = prepped["w1"], prepped["b1"]
    w2, b2 = prepped["w2"], prepped["b2"]
    w3, b3 = prepped["w3"], prepped["b3"]

    batch, num_states = x.shape
    hidden = w1.shape[1]
    na_pad = w3.shape[1]

    # Batch tile: multiple of 8, default large (amortizes per-step overhead),
    # capped at ceil(batch/2) rounded to 8 so big batches give >= 2 tiles (v7x megacore).
    half = _round_up(max(1, -(-batch // 2)), SUBLANE)
    tb = max(SUBLANE, min(_round_up(batch_tile, SUBLANE), half))
    grid = (pl.cdiv(batch, tb),)
    rows = grid[0] * tb

    flops = 2 * rows * (num_states * hidden + hidden * hidden + hidden * na_pad)
    bytes_accessed = (batch * num_states * 4                     # x f32 read
                      + (w1.size + w2.size + w3.size) * 2        # bf16 weights
                      + (b1.size + b2.size + b3.size) * 4        # f32 biases
                      + rows * na_pad * 2)                       # bf16 output write

    const2d = lambda a: pl.BlockSpec(a.shape, lambda i: (0, 0))  # VMEM-resident weights/biases

    out_padded = pl.pallas_call(
        qnet_kernel,
        out_shape=jax.ShapeDtypeStruct((batch, na_pad), jnp.bfloat16),
        grid=grid,
        in_specs=[
            pl.BlockSpec((tb, num_states), lambda i: (i, 0)),    # x: batch-tiled, f32
            const2d(w1), const2d(b1),
            const2d(w2), const2d(b2),
            const2d(w3), const2d(b3),
        ],
        out_specs=pl.BlockSpec((tb, na_pad), lambda i: (i, 0)),  # lane-dense bf16 slab
        compiler_params=pltpu.CompilerParams(
            dimension_semantics=("parallel",),                   # megacore split on v7x
        ),
        cost_estimate=pl.CostEstimate(
            flops=flops, transcendentals=0, bytes_accessed=bytes_accessed),
    )(x, w1, b1, w2, b2, w3, b3)

    # Slice off padded (zero-weight) action lanes; upcast the tiny result to f32.
    return out_padded[:, :num_actions].astype(jnp.float32)


def init_params(key, num_states, num_actions, hidden=64):
    """Deterministic init mimicking PyTorch nn.Linear default (uniform ±1/sqrt(fan_in)).

    Weight layout is (in_features, out_features) — PyTorch weight transposed — so the
    kernel computes x @ W + b directly on the MXU.  Biases are (1, out_features).
    """
    ks = jax.random.split(key, 6)

    def linear(kw, kb, fan_in, fan_out):
        bound = 1.0 / jnp.sqrt(jnp.float32(fan_in))
        w = jax.random.uniform(kw, (fan_in, fan_out), jnp.float32, -bound, bound)
        b = jax.random.uniform(kb, (1, fan_out), jnp.float32, -bound, bound)
        return w, b

    w1, b1 = linear(ks[0], ks[1], num_states, hidden)
    w2, b2 = linear(ks[2], ks[3], hidden, hidden)
    w3, b3 = linear(ks[4], ks[5], hidden, num_actions)
    return {"w1": w1, "b1": b1, "w2": w2, "b2": b2, "w3": w3, "b3": b3}


def reference_forward_bf16(x, p):
    """Same bf16-input / f32-accumulate / bf16-output math as the kernel, in plain JAX."""
    xb = x.astype(jnp.bfloat16)
    w1 = p["w1"].astype(jnp.bfloat16)
    w2 = p["w2"].astype(jnp.bfloat16)
    w3 = p["w3"].astype(jnp.bfloat16)
    h1 = jnp.maximum(jnp.dot(xb, w1, preferred_element_type=jnp.float32) + p["b1"], 0.0)
    h2 = jnp.maximum(jnp.dot(h1.astype(jnp.bfloat16), w2,
                             preferred_element_type=jnp.float32) + p["b2"], 0.0)
    out = jnp.dot(h2.astype(jnp.bfloat16), w3,
                  preferred_element_type=jnp.float32) + p["b3"]
    return out.astype(jnp.bfloat16).astype(jnp.float32)


def reference_forward_f32(x, p):
    h1 = jnp.maximum(x @ p["w1"] + p["b1"], 0.0)
    h2 = jnp.maximum(h1 @ p["w2"] + p["b2"], 0.0)
    return h2 @ p["w3"] + p["b3"]


# TODO(synk): for the true multi-agent path (one QNetwork per agent, batch~8), stack
# per-agent weights as (A, in, out) and fold the agent axis into the grid (or into the
# batch) so a single pallas_call amortizes the launch/DMA-prologue cost across agents.

if __name__ == "__main__":
    key = jax.random.PRNGKey(0)
    k_param, k_x = jax.random.split(key)

    batch = 8
    num_states = 16   # e.g. inventory-level state encoding
    num_actions = 4   # e.g. order quantities

    params = init_params(k_param, num_states, num_actions)
    prepped, na = prepare_params(params)     # one-time weight prep (padding + bf16)
    x = jax.random.normal(k_x, (batch, num_states), jnp.float32)

    out = qnetwork_forward(x, prepped, num_actions=na)
    out = jax.block_until_ready(out)

    ref_bf16 = reference_forward_bf16(x, params)
    ref_f32 = reference_forward_f32(x, params)

    assert out.shape == (batch, num_actions)
    # Tight check against a bf16-input / f32-accumulate / bf16-output reference
    # (same math as the kernel).
    assert jnp.allclose(out, ref_bf16, atol=2e-2, rtol=2e-2), (
        f"max abs err vs bf16 ref: {jnp.max(jnp.abs(out - ref_bf16))}")
    # Loose sanity check against the pure-f32 PyTorch-equivalent forward.
    assert jnp.allclose(out, ref_f32, atol=7e-2, rtol=7e-2), (
        f"max abs err vs f32 ref: {jnp.max(jnp.abs(out - ref_f32))}")

    print("KERNEL_OK")
</pallas_src>

<mosaic_0001>
module attributes {stable_mosaic.version = 11 : i64} {
  func.func @qnet_kernel(%arg0: i32, %arg1: memref<8x16xf32, #tpu.memory_space<vmem>>, %arg2: memref<16x64xbf16, #tpu.memory_space<vmem>>, %arg3: memref<1x64xf32, #tpu.memory_space<vmem>>, %arg4: memref<64x64xbf16, #tpu.memory_space<vmem>>, %arg5: memref<1x64xf32, #tpu.memory_space<vmem>>, %arg6: memref<64x128xbf16, #tpu.memory_space<vmem>>, %arg7: memref<1x128xf32, #tpu.memory_space<vmem>>, %arg8: memref<8x128xbf16, #tpu.memory_space<vmem>>) attributes {dimension_semantics = [#tpu.dimension_semantics<parallel>], iteration_bounds = array<i64: 1>, scalar_prefetch = 0 : i64, scratch_operands = 0 : i64, tpu.core_type = #tpu.core_type<tc>, window_params = [{transform_indices = @transform_0, window_bounds = array<i64: 8, 16>}, {pipeline_mode = #tpu.pipeline_mode<synchronous>, transform_indices = @transform_1, window_bounds = array<i64: 16, 64>}, {pipeline_mode = #tpu.pipeline_mode<synchronous>, transform_indices = @transform_2, window_bounds = array<i64: 1, 64>}, {pipeline_mode = #tpu.pipeline_mode<synchronous>, transform_indices = @transform_3, window_bounds = array<i64: 64, 64>}, {pipeline_mode = #tpu.pipeline_mode<synchronous>, transform_indices = @transform_4, window_bounds = array<i64: 1, 64>}, {pipeline_mode = #tpu.pipeline_mode<synchronous>, transform_indices = @transform_5, window_bounds = array<i64: 64, 128>}, {pipeline_mode = #tpu.pipeline_mode<synchronous>, transform_indices = @transform_6, window_bounds = array<i64: 1, 128>}, {transform_indices = @transform_7, window_bounds = array<i64: 8, 128>}]} {
    %c0 = arith.constant 0 : index
    %c0_0 = arith.constant 0 : index
    %0 = vector.load %arg1[%c0, %c0_0] : memref<8x16xf32, #tpu.memory_space<vmem>>, vector<8x16xf32>
    %1 = arith.truncf %0 : vector<8x16xf32> to vector<8x16xbf16>
    %c0_1 = arith.constant 0 : index
    %c0_2 = arith.constant 0 : index
    %2 = vector.load %arg2[%c0_1, %c0_2] : memref<16x64xbf16, #tpu.memory_space<vmem>>, vector<16x64xbf16>
    %cst = arith.constant dense<0.000000e+00> : vector<8x64xf32>
    %3 = tpu.matmul %1, %2, %cst {dimension_numbers = #tpu.dot_dimension_numbers<[1], [0], [0], [1], [0, 0, 1, 1], [], []>} : vector<8x16xbf16>, vector<16x64xbf16>, vector<8x64xf32> -> vector<8x64xf32>
    %c0_3 = arith.constant 0 : index
    %c0_4 = arith.constant 0 : index
    %4 = vector.load %arg3[%c0_3, %c0_4] : memref<1x64xf32, #tpu.memory_space<vmem>>, vector<1x64xf32>
    %5 = vector.broadcast %4 : vector<1x64xf32> to vector<8x64xf32>
    %6 = arith.addf %3, %5 : vector<8x64xf32>
    %cst_5 = arith.constant 0.000000e+00 : f32
    %7 = vector.broadcast %cst_5 : f32 to vector<8x64xf32>
    %8 = arith.maximumf %6, %7 : vector<8x64xf32>
    %9 = arith.truncf %8 : vector<8x64xf32> to vector<8x64xbf16>
    %c0_6 = arith.constant 0 : index
    %c0_7 = arith.constant 0 : index
    %10 = vector.load %arg4[%c0_6, %c0_7] : memref<64x64xbf16, #tpu.memory_space<vmem>>, vector<64x64xbf16>
    %cst_8 = arith.constant dense<0.000000e+00> : vector<8x64xf32>
    %11 = tpu.matmul %9, %10, %cst_8 {dimension_numbers = #tpu.dot_dimension_numbers<[1], [0], [0], [1], [0, 0, 1, 1], [], []>} : vector<8x64xbf16>, vector<64x64xbf16>, vector<8x64xf32> -> vector<8x64xf32>
    %c0_9 = arith.constant 0 : index
    %c0_10 = arith.constant 0 : index
    %12 = vector.load %arg5[%c0_9, %c0_10] : memref<1x64xf32, #tpu.memory_space<vmem>>, vector<1x64xf32>
    %13 = vector.broadcast %12 : vector<1x64xf32> to vector<8x64xf32>
    %14 = arith.addf %11, %13 : vector<8x64xf32>
    %cst_11 = arith.constant 0.000000e+00 : f32
    %15 = vector.broadcast %cst_11 : f32 to vector<8x64xf32>
    %16 = arith.maximumf %14, %15 : vector<8x64xf32>
    %17 = arith.truncf %16 : vector<8x64xf32> to vector<8x64xbf16>
    %c0_12 = arith.constant 0 : index
    %c0_13 = arith.constant 0 : index
    %18 = vector.load %arg6[%c0_12, %c0_13] : memref<64x128xbf16, #tpu.memory_space<vmem>>, vector<64x128xbf16>
    %cst_14 = arith.constant dense<0.000000e+00> : vector<8x128xf32>
    %19 = tpu.matmul %17, %18, %cst_14 {dimension_numbers = #tpu.dot_dimension_numbers<[1], [0], [0], [1], [0, 0, 1, 1], [], []>} : vector<8x64xbf16>, vector<64x128xbf16>, vector<8x128xf32> -> vector<8x128xf32>
    %c0_15 = arith.constant 0 : index
    %c0_16 = arith.constant 0 : index
    %20 = vector.load %arg7[%c0_15, %c0_16] : memref<1x128xf32, #tpu.memory_space<vmem>>, vector<1x128xf32>
    %21 = vector.broadcast %20 : vector<1x128xf32> to vector<8x128xf32>
    %22 = arith.addf %19, %21 : vector<8x128xf32>
    %23 = arith.truncf %22 : vector<8x128xf32> to vector<8x128xbf16>
    %c0_17 = arith.constant 0 : index
    %c0_18 = arith.constant 0 : index
    %24 = vector.load %arg8[%c0_17, %c0_18] : memref<8x128xbf16, #tpu.memory_space<vmem>>, vector<8x128xbf16>
    tpu.vector_store %arg8[%c0_17, %c0_18], %23 {strides = array<i32>} : memref<8x128xbf16, #tpu.memory_space<vmem>>, vector<8x128xbf16>,
    return
  }
  func.func @transform_0(%arg0: i32) -> (i32, i32) {
    %c0_i32 = arith.constant 0 : i32
    %c0_i32_0 = arith.constant 0 : i32
    return %arg0, %c0_i32 : i32, i32
  }
  func.func @transform_1(%arg0: i32) -> (i32, i32) {
    %c0_i32 = arith.constant 0 : i32
    %c0_i32_0 = arith.constant 0 : i32
    %c0_i32_1 = arith.constant 0 : i32
    return %c0_i32, %c0_i32_0 : i32, i32
  }
  func.func @transform_2(%arg0: i32) -> (i32, i32) {
    %c0_i32 = arith.constant 0 : i32
    %c0_i32_0 = arith.constant 0 : i32
    %c0_i32_1 = arith.constant 0 : i32
    return %c0_i32, %c0_i32_0 : i32, i32
  }
  func.func @transform_3(%arg0: i32) -> (i32, i32) {
    %c0_i32 = arith.constant 0 : i32
    %c0_i32_0 = arith.constant 0 : i32
    %c0_i32_1 = arith.constant 0 : i32
    return %c0_i32, %c0_i32_0 : i32, i32
  }
  func.func @transform_4(%arg0: i32) -> (i32, i32) {
    %c0_i32 = arith.constant 0 : i32
    %c0_i32_0 = arith.constant 0 : i32
    %c0_i32_1 = arith.constant 0 : i32
    return %c0_i32, %c0_i32_0 : i32, i32
  }
  func.func @transform_5(%arg0: i32) -> (i32, i32) {
    %c0_i32 = arith.constant 0 : i32
    %c0_i32_0 = arith.constant 0 : i32
    %c0_i32_1 = arith.constant 0 : i32
    return %c0_i32, %c0_i32_0 : i32, i32
  }
  func.func @transform_6(%arg0: i32) -> (i32, i32) {
    %c0_i32 = arith.constant 0 : i32
    %c0_i32_0 = arith.constant 0 : i32
    %c0_i32_1 = arith.constant 0 : i32
    return %c0_i32, %c0_i32_0 : i32, i32
  }
  func.func @transform_7(%arg0: i32) -> (i32, i32) {
    %c0_i32 = arith.constant 0 : i32
    %c0_i32_0 = arith.constant 0 : i32
    return %arg0, %c0_i32 : i32, i32
  }
}

</mosaic_0001>

<llo_original>
// kernel: qnetwork_forward.1
$region0: #{qnetwork_forward.1}
  #allocation0 [shape = 'u32[]', space=smem, size = 0x4, offset = 0x4, fixed_abs, tag = 'smem constant byte address 0x4 - core index']
  #allocation1 [shape = 'u32[144,128]{1,0:T(1,128)}', space=vmem, size = 0x12000, scoped, tag = 'internal scratch']
  %s0 = inlined_call_operand.hbm [shape: f32[8,16], index: 0, kind: input, shape index: {}]
  %s1 = inlined_call_operand.vmem [shape: bf16[16,64], index: 1, kind: input, shape index: {}]
  %s2 = inlined_call_operand.vmem [shape: f32[1,64], index: 2, kind: input, shape index: {}]
  %s3 = inlined_call_operand.hbm [shape: bf16[64,64], index: 3, kind: input, shape index: {}]
  %s4 = inlined_call_operand.vmem [shape: f32[1,64], index: 4, kind: input, shape index: {}]
  %s5 = inlined_call_operand.hbm [shape: bf16[64,128], index: 5, kind: input, shape index: {}]
  %s6 = inlined_call_operand.vmem [shape: f32[1,128], index: 6, kind: input, shape index: {}]
  %s7 = inlined_call_operand.vmem [shape: bf16[8,128], index: 7, kind: output, shape index: {}]
  %s8 = sld [smem:[#allocation0]]
  $region50: #{qnetwork_forward.1} parent=0
    _
  %s10 = ssub.s32 1, %s8
  %s11 = scalar_select 0, %s10, %s8
  $region1: #{qnetwork_forward.1} parent=0
    #allocation2 [shape = 'u8[4096]{0}', space=vmem, size = 0x1000, scoped, tag = 'input window, operand 0, single buffered']
    #allocation3 [shape = 's32[1]{0}', space=sflag, size = 0x4, scoped, tag = 'scoped memory for qnetwork_forward.1']
    #allocation4 [shape = 'u8[16384]{0}', space=vmem, size = 0x4000, scoped, tag = 'input window, operand 3, single buffered']
    #allocation5 [shape = 's32[1]{0}', space=sflag, size = 0x4, scoped, tag = 'scoped memory for qnetwork_forward.1']
    #allocation6 [shape = 'u8[16384]{0}', space=vmem, size = 0x4000, scoped, tag = 'input window, operand 5, single buffered']
    %12 = vsyncpa [#allocation3], 0
    %13 = vsyncpa [#allocation5], 0
    // Predicated region
    $region2: #{qnetwork_forward.1} parent=1 // pred_check
      _
    $region3: #{qnetwork_forward.1} parent=1 // pred_check_branch
      %15 = sbr.rel (0) target = $region5
    $region4: #{qnetwork_forward.1} parent=1 // pred_region
      %s17 = ssub.s32 128, 128
      %18 = vsyncadd [#allocation3], %s17
      %s20 = sshll.u32 [#allocation2], 4
      %s21 = int_to_ptr.vmem [resolvable:$true] %s20
      %23 = dma.hbm_to_vmem [thread:$0]  %s0, 128, %s21, [#allocation3]
    $region5: #{qnetwork_forward.1} parent=1 // pred_fallthru
      _
    // Predicated region
    $region6: #{qnetwork_forward.1} parent=1 // pred_check
      _
    $region7: #{qnetwork_forward.1} parent=1 // pred_check_branch
      %25 = sbr.rel (0) target = $region9
    $region8: #{qnetwork_forward.1} parent=1 // pred_region
      _
    $region9: #{qnetwork_forward.1} parent=1 // pred_fallthru
      _
    // Predicated region
    $region10: #{qnetwork_forward.1} parent=1 // pred_check
      _
    $region11: #{qnetwork_forward.1} parent=1 // pred_check_branch
      %27 = sbr.rel (0) target = $region13
    $region12: #{qnetwork_forward.1} parent=1 // pred_region
      _
    $region13: #{qnetwork_forward.1} parent=1 // pred_fallthru
      _
    // Predicated region
    $region14: #{qnetwork_forward.1} parent=1 // pred_check
      _
    $region15: #{qnetwork_forward.1} parent=1 // pred_check_branch
      %29 = sbr.rel (0) target = $region17
    $region16: #{qnetwork_forward.1} parent=1 // pred_region
      %s31 = ssub.s32 512, 512
      %32 = vsyncadd [#allocation5], %s31
      %s33 = sshll.u32 [#allocation4], 4
      %s34 = int_to_ptr.vmem [resolvable:$true] %s33
      %39 = dma.hbm_to_vmem [thread:$0]  %s3, 512, %s34, [#allocation5], 64, 64, 4
    $region17: #{qnetwork_forward.1} parent=1 // pred_fallthru
      _
    // Predicated region
    $region18: #{qnetwork_forward.1} parent=1 // pred_check
      _
    $region19: #{qnetwork_forward.1} parent=1 // pred_check_branch
      %41 = sbr.rel (0) target = $region21
    $region20: #{qnetwork_forward.1} parent=1 // pred_region
      _
    $region21: #{qnetwork_forward.1} parent=1 // pred_fallthru
      _
    // Predicated region
    $region22: #{qnetwork_forward.1} parent=1 // pred_check
      _
    $region23: #{qnetwork_forward.1} parent=1 // pred_check_branch
      %43 = sbr.rel (0) target = $region25
    $region24: #{qnetwork_forward.1} parent=1 // pred_region
      %s45 = ssub.s32 512, 512
      %46 = vsyncadd [#allocation5], %s45
      %s47 = sshll.u32 [#allocation6], 4
      %s48 = int_to_ptr.vmem [resolvable:$true] %s47
      %53 = dma.hbm_to_vmem [thread:$0]  %s5, 512, %s48, [#allocation5], 64, 64, 4
    $region25: #{qnetwork_forward.1} parent=1 // pred_fallthru
      _
    // Predicated region
    $region26: #{qnetwork_forward.1} parent=1 // pred_check
      _
    $region27: #{qnetwork_forward.1} parent=1 // pred_check_branch
      %55 = sbr.rel (0) target = $region29
    $region28: #{qnetwork_forward.1} parent=1 // pred_region
      _
    $region29: #{qnetwork_forward.1} parent=1 // pred_fallthru
      _
    // Predicated region
    $region30: #{qnetwork_forward.1} parent=1 // pred_check
      _
    $region31: #{qnetwork_forward.1} parent=1 // pred_check_branch
      %57 = sbr.rel (0) target = $region33
    $region32: #{qnetwork_forward.1} parent=1 // pred_region
      %58 = dma.done [#allocation3], 128
    $region33: #{qnetwork_forward.1} parent=1 // pred_fallthru
      _
    // Predicated region
    $region34: #{qnetwork_forward.1} parent=1 // pred_check
      _
    $region35: #{qnetwork_forward.1} parent=1 // pred_check_branch
      %60 = sbr.rel (0) target = $region37
    $region36: #{qnetwork_forward.1} parent=1 // pred_region
      %61 = dma.done [#allocation5], 512
    $region37: #{qnetwork_forward.1} parent=1 // pred_fallthru
      _
    // Predicated region
    $region38: #{qnetwork_forward.1} parent=1 // pred_check
      _
    $region39: #{qnetwork_forward.1} parent=1 // pred_check_branch
      %63 = sbr.rel (0) target = $region41
    $region40: #{qnetwork_forward.1} parent=1 // pred_region
      %64 = dma.done [#allocation5], 512
    $region41: #{qnetwork_forward.1} parent=1 // pred_fallthru
      _
    %v66 = vld [vmem:[#allocation2] sm:$0xff]
    %v67 = vpack.c.bf16 %v66, %v66
    %v68 = vld [vmem:[%s1] sm:$0xf]
    %v69 = vld [vmem:[%s1 + $0x4] sm:$0xf]
    %v70 = vld [vmem:[%s2] sm:$0x1]
    %v72 = vlaneseq
    %v73 = vshrl.u32 %v72, 7
    %v74 = vsub.s32 0, %v73
    %v75 = vrot.slane %v70, %v74
    %v79 = vunpack.c.l.b16 %v68
    %v80 = vunpack.c.l.b16 %v69
    %v81 = vpack.c.b16 %v80, %v79
    %vm83 = vcmask 130048
    %v85 = vsel %vm83, %v67, 0
    %87 = vmatprep.subr.bf16.mxu0 0
    %88 = vmatpush1.bf16.msra.mxu0 %v81
    %89 = vmatprep.subr.bf16.mxu0 0
    %90 = vmatpush1.bf16.msra.mxu0 0
    %91 = vmatprep.subr.bf16.mxu0 0
    %92 = vmatpush1.bf16.msra.mxu0 0
    %93 = vmatprep.subr.bf16.mxu0 0
    %94 = vmatpush1.bf16.msra.mxu0 0
    %95 = vmatprep.subr.bf16.mxu0 0
    %96 = vmatpush1.bf16.msra.mxu0 0
    %97 = vmatprep.subr.bf16.mxu0 0
    %98 = vmatpush1.bf16.msra.mxu0 0
    %99 = vmatprep.subr.bf16.mxu0 0
    %100 = vmatpush1.bf16.msra.mxu0 0
    %101 = vmatprep.subr.bf16.mxu0 0
    %102 = vmatpush1.bf16.msra.mxu0 0
    %103 = vmatprep.subr.bf16.mxu0 0
    %104 = vmatpush1.bf16.msra.mxu0 0
    %105 = vmatprep.subr.bf16.mxu0 0
    %106 = vmatpush1.bf16.msra.mxu0 0
    %107 = vmatprep.subr.bf16.mxu0 0
    %108 = vmatpush1.bf16.msra.mxu0 0
    %109 = vmatprep.subr.bf16.mxu0 0
    %110 = vmatpush1.bf16.msra.mxu0 0
    %111 = vmatprep.subr.bf16.mxu0 0
    %112 = vmatpush1.bf16.msra.mxu0 0
    %113 = vmatprep.subr.bf16.mxu0 0
    %114 = vmatpush1.bf16.msra.mxu0 0
    %115 = vmatprep.subr.bf16.mxu0 0
    %116 = vmatpush1.bf16.msra.mxu0 0
    %117 = vmatprep.subr.bf16.mxu0 0
    %118 = vmatpush1.bf16.msra.mxu0 0
    %119 = vmatprep.mubr.bf16.mxu0 0
    %120 = vmatmul.mubr.bf16.gmra.mrb[0].mxu0 %v85
    %v121 = vpop.f32.mrb[0].mxu0
    %v122 = vadd.f32 %v75, %v121
    %v123 = vpop.f32.mrb[0].mxu0
    %v124 = vpop.f32.mrb[0].mxu0
    %v125 = vpop.f32.mrb[0].mxu0
    %126 = vdwg.mxu0
    %v127 = vmax.f32 %v122, 0.0
    %v128 = vpack.c.bf16 %v127, %v127
    %v129 = vld [vmem:[#allocation4] sm:$0xf]
    %v130 = vld [vmem:[#allocation4 + $0x4] sm:$0xf]
    %v131 = vld [vmem:[#allocation4 + $0x8] sm:$0xf]
    %v132 = vld [vmem:[#allocation4 + $0xc] sm:$0xf]
    %v133 = vld [vmem:[#allocation4 + $0x10] sm:$0xf]
    %v134 = vld [vmem:[#allocation4 + $0x14] sm:$0xf]
    %v135 = vld [vmem:[#allocation4 + $0x18] sm:$0xf]
    %v136 = vld [vmem:[#allocation4 + $0x1c] sm:$0xf]
    %v137 = vld [vmem:[%s4] sm:$0x1]
    %v139 = vlaneseq
    %v140 = vshrl.u32 %v139, 7
    %v141 = vsub.s32 0, %v140
    %v142 = vrot.slane %v137, %v141
    %v152 = vunpack.c.l.b16 %v129
    %v153 = vunpack.c.l.b16 %v130
    %v154 = vunpack.c.l.b16 %v131
    %v155 = vunpack.c.l.b16 %v132
    %v156 = vunpack.c.l.b16 %v133
    %v157 = vunpack.c.l.b16 %v134
    %v158 = vunpack.c.l.b16 %v135
    %v159 = vunpack.c.l.b16 %v136
    %v160 = vpack.c.b16 %v153, %v152
    %v161 = vpack.c.b16 %v155, %v154
    %v162 = vpack.c.b16 %v157, %v156
    %v163 = vpack.c.b16 %v159, %v158
    %vm168 = vcmask 523264
    %v170 = vsel %vm168, %v128, 0
    %172 = vmatprep.subr.bf16.mxu0 0
    %173 = vmatpush1.bf16.msra.mxu0 %v160
    %174 = vmatprep.subr.bf16.mxu0 0
    %175 = vmatpush1.bf16.msra.mxu0 %v161
    %176 = vmatprep.subr.bf16.mxu0 0
    %177 = vmatpush1.bf16.msra.mxu0 %v162
    %178 = vmatprep.subr.bf16.mxu0 0
    %179 = vmatpush1.bf16.msra.mxu0 %v163
    %180 = vmatprep.subr.bf16.mxu0 0
    %181 = vmatpush1.bf16.msra.mxu0 0
    %182 = vmatprep.subr.bf16.mxu0 0
    %183 = vmatpush1.bf16.msra.mxu0 0
    %184 = vmatprep.subr.bf16.mxu0 0
    %185 = vmatpush1.bf16.msra.mxu0 0
    %186 = vmatprep.subr.bf16.mxu0 0
    %187 = vmatpush1.bf16.msra.mxu0 0
    %188 = vmatprep.subr.bf16.mxu0 0
    %189 = vmatpush1.bf16.msra.mxu0 0
    %190 = vmatprep.subr.bf16.mxu0 0
    %191 = vmatpush1.bf16.msra.mxu0 0
    %192 = vmatprep.subr.bf16.mxu0 0
    %193 = vmatpush1.bf16.msra.mxu0 0
    %194 = vmatprep.subr.bf16.mxu0 0
    %195 = vmatpush1.bf16.msra.mxu0 0
    %196 = vmatprep.subr.bf16.mxu0 0
    %197 = vmatpush1.bf16.msra.mxu0 0
    %198 = vmatprep.subr.bf16.mxu0 0
    %199 = vmatpush1.bf16.msra.mxu0 0
    %200 = vmatprep.subr.bf16.mxu0 0
    %201 = vmatpush1.bf16.msra.mxu0 0
    %202 = vmatprep.subr.bf16.mxu0 0
    %203 = vmatpush1.bf16.msra.mxu0 0
    %204 = vmatprep.mubr.bf16.mxu0 0
    %205 = vmatmul.mubr.bf16.gmra.mrb[0].mxu0 %v170
    %v206 = vpop.f32.mrb[0].mxu0
    %v207 = vadd.f32 %v142, %v206
    %v208 = vpop.f32.mrb[0].mxu0
    %v209 = vpop.f32.mrb[0].mxu0
    %v210 = vpop.f32.mrb[0].mxu0
    %211 = vdwg.mxu0
    %v212 = vmax.f32 %v207, 0.0
    %v213 = vpack.c.bf16 %v212, %v212
    %v214 = vld [vmem:[#allocation6] sm:$0xf]
    %v215 = vld [vmem:[#allocation6 + $0x4] sm:$0xf]
    %v216 = vld [vmem:[#allocation6 + $0x8] sm:$0xf]
    %v217 = vld [vmem:[#allocation6 + $0xc] sm:$0xf]
    %v218 = vld [vmem:[#allocation6 + $0x10] sm:$0xf]
    %v219 = vld [vmem:[#allocation6 + $0x14] sm:$0xf]
    %v220 = vld [vmem:[#allocation6 + $0x18] sm:$0xf]
    %v221 = vld [vmem:[#allocation6 + $0x1c] sm:$0xf]
    %v222 = vld [vmem:[%s6] sm:$0x1]
    %v224 = vlaneseq
    %v225 = vshrl.u32 %v224, 7
    %v226 = vsub.s32 0, %v225
    %v227 = vrot.slane %v222, %v226
    %v237 = vunpack.c.l.b16 %v214
    %v238 = vunpack.c.l.b16 %v215
    %v239 = vunpack.c.l.b16 %v216
    %v240 = vunpack.c.l.b16 %v217
    %v241 = vunpack.c.l.b16 %v218
    %v242 = vunpack.c.l.b16 %v219
    %v243 = vunpack.c.l.b16 %v220
    %v244 = vunpack.c.l.b16 %v221
    %v245 = vpack.c.b16 %v238, %v237
    %v246 = vpack.c.b16 %v240, %v239
    %v247 = vpack.c.b16 %v242, %v241
    %v248 = vpack.c.b16 %v244, %v243
    %v254 = vsel %vm168, %v213, 0
    %256 = vmatprep.subr.bf16.mxu0 0
    %257 = vmatpush1.bf16.msra.mxu0 %v245
    %258 = vmatprep.subr.bf16.mxu0 0
    %259 = vmatpush1.bf16.msra.mxu0 %v246
    %260 = vmatprep.subr.bf16.mxu0 0
    %261 = vmatpush1.bf16.msra.mxu0 %v247
    %262 = vmatprep.subr.bf16.mxu0 0
    %263 = vmatpush1.bf16.msra.mxu0 %v248
    %264 = vmatprep.subr.bf16.mxu0 0
    %265 = vmatpush1.bf16.msra.mxu0 0
    %266 = vmatprep.subr.bf16.mxu0 0
    %267 = vmatpush1.bf16.msra.mxu0 0
    %268 = vmatprep.subr.bf16.mxu0 0
    %269 = vmatpush1.bf16.msra.mxu0 0
    %270 = vmatprep.subr.bf16.mxu0 0
    %271 = vmatpush1.bf16.msra.mxu0 0
    %272 = vmatprep.subr.bf16.mxu0 0
    %273 = vmatpush1.bf16.msra.mxu0 0
    %274 = vmatprep.subr.bf16.mxu0 0
    %275 = vmatpush1.bf16.msra.mxu0 0
    %276 = vmatprep.subr.bf16.mxu0 0
    %277 = vmatpush1.bf16.msra.mxu0 0
    %278 = vmatprep.subr.bf16.mxu0 0
    %279 = vmatpush1.bf16.msra.mxu0 0
    %280 = vmatprep.subr.bf16.mxu0 0
    %281 = vmatpush1.bf16.msra.mxu0 0
    %282 = vmatprep.subr.bf16.mxu0 0
    %283 = vmatpush1.bf16.msra.mxu0 0
    %284 = vmatprep.subr.bf16.mxu0 0
    %285 = vmatpush1.bf16.msra.mxu0 0
    %286 = vmatprep.subr.bf16.mxu0 0
    %287 = vmatpush1.bf16.msra.mxu0 0
    %288 = vmatprep.mubr.bf16.mxu0 0
    %289 = vmatmul.mubr.bf16.gmra.mrb[0].mxu0 %v254
    %v290 = vpop.f32.mrb[0].mxu0
    %v291 = vadd.f32 %v227, %v290
    %v292 = vpop.f32.mrb[0].mxu0
    %v293 = vpop.f32.mrb[0].mxu0
    %v294 = vpop.f32.mrb[0].mxu0
    %295 = vdwg.mxu0
    %v296 = vpack.c.bf16 %v291, %v291
    %297 = vst [vmem:[%s7] sm:$0xf] %v296
    // Predicated region
    $region42: #{qnetwork_forward.1} parent=1 // pred_check
      _
    $region43: #{qnetwork_forward.1} parent=1 // pred_check_branch
      %299 = sbr.rel (0) target = $region45
    $region44: #{qnetwork_forward.1} parent=1 // pred_region
      _
    $region45: #{qnetwork_forward.1} parent=1 // pred_fallthru
      _
    // Predicated region
    $region46: #{qnetwork_forward.1} parent=1 // pred_check
      _
    $region47: #{qnetwork_forward.1} parent=1 // pred_check_branch
      %301 = sbr.rel (0) target = $region49
    $region48: #{qnetwork_forward.1} parent=1 // pred_region
      _
    $region49: #{qnetwork_forward.1} parent=1 // pred_fallthru
      _
    %302 = vsyncpa [#allocation3], 1
    %303 = vsyncpa [#allocation5], 1

</llo_original>
